<compile_context>
chip_gen: v7x
topology: tpu7x:2x2x1
jax: 0.10.0
libtpu: 0.0.40
codegen_flags: <defaults>
</compile_context>

<pallas_src>
import numpy as np
import jax
import jax.numpy as jnp
from jax.experimental import pallas as pl
from jax.experimental.pallas import tpu as pltpu


# ----------------------------------------------------------------------------
# Host-side construction of the separable 1-D operators (parameter setup/glue).
# ----------------------------------------------------------------------------
def _avgpool_matrix(n_in: int, kernel: int = 3, stride: int = 2, pad: int = 1) -> np.ndarray:
    """1-D operator for AvgPool(kernel, stride, pad, count_include_pad=False)."""
    n_out = (n_in + 2 * pad - kernel) // stride + 1
    m = np.zeros((n_out, n_in), dtype=np.float32)
    for i in range(n_out):
        start = i * stride - pad
        valid = [r for r in range(start, start + kernel) if 0 <= r < n_in]
        for r in valid:
            m[i, r] = 1.0 / len(valid)          # divisor = #valid elements
    return m


def _bilinear_matrix(n_in: int, n_out: int) -> np.ndarray:
    """1-D operator for bilinear upsample with align_corners=True."""
    m = np.zeros((n_out, n_in), dtype=np.float32)
    if n_out == 1:
        m[0, 0] = 1.0
        return m
    scale = (n_in - 1) / (n_out - 1)
    for i in range(n_out):
        src = i * scale
        i0 = min(int(np.floor(src)), n_in - 1)
        i1 = min(i0 + 1, n_in - 1)
        frac = src - i0
        m[i, i0] += 1.0 - frac
        m[i, i1] += frac
    return m


def _choose_batch(nc: int, w: int, wo: int) -> int:
    """Pick images-per-grid-step so lane dims (B*W, B*Wo) are >=128 and
    128-aligned when more than one block is used; keep the block-diag operator
    small enough for VMEM (v7x-safe)."""
    for b in range(1, nc + 1):
        if nc % b:
            continue
        lanes_in, lanes_out = b * w, b * wo
        if lanes_in < 128 or lanes_out < 128:
            continue
        if (nc // b) > 1 and (lanes_in % 128 or lanes_out % 128):
            continue
        if 4 * lanes_in * lanes_out > (8 << 20):   # cap block-diag at 8 MiB
            continue
        return b
    return nc                                      # tiny problem: single block


# ----------------------------------------------------------------------------
# Pallas kernel: two lane-dense 2-D GEMMs, no in-kernel transpose/reshape.
# ----------------------------------------------------------------------------
def downsample_kernel(x_ref, mh_ref, mwbd_ref, o_ref):
    # x_ref:   (H, B*W)      stacked input columns (B images along lanes)
    # mh_ref:  (Ho, H)       fused row operator
    # mwbd_ref:(B*W, B*Wo)   block-diagonal of M_w^T (transposed on host)
    # o_ref:   (Ho, B*Wo)    lane-dense output slab
    y = jnp.dot(mh_ref[...], x_ref[...], preferred_element_type=jnp.float32)
    z = jnp.dot(y, mwbd_ref[...], preferred_element_type=jnp.float32)
    o_ref[...] = z.astype(o_ref.dtype)


def downsample_forward(x: jax.Array) -> jax.Array:
    """x: (N, C, H, W) float32  ->  (N, C, Ho, Wo)."""
    N, C, H, W = x.shape
    NC = N * C

    # pool #1, pool #2, bilinear x4 (align_corners=True)
    ph1, pw1 = _avgpool_matrix(H), _avgpool_matrix(W)
    ph2, pw2 = _avgpool_matrix(ph1.shape[0]), _avgpool_matrix(pw1.shape[0])
    Ho, Wo = ph2.shape[0] * 4, pw2.shape[0] * 4
    uh = _bilinear_matrix(ph2.shape[0], Ho)
    uw = _bilinear_matrix(pw2.shape[0], Wo)

    mh = (uh @ ph2 @ ph1).astype(np.float32)        # (Ho, H)
    mw = (uw @ pw2 @ pw1).astype(np.float32)        # (Wo, W)
    mwT = np.ascontiguousarray(mw.T)                # (W, Wo), transposed on host

    B = _choose_batch(NC, W, Wo)
    num_blocks = NC // B

    # Block-diagonal M_w^T so the second GEMM handles all B images at once
    # with a 128-wide contraction dim and a lane-dense (B*Wo) output.
    mwbd = np.kron(np.eye(B, dtype=np.float32), mwT)          # (B*W, B*Wo)

    # Wrapper-side layout plumbing: (N,C,H,W) -> (H, NC*W) with images stacked
    # contiguously along the lane axis.
    x_stacked = x.reshape(NC, H, W).transpose(1, 0, 2).reshape(H, NC * W)

    out_stacked = pl.pallas_call(
        downsample_kernel,
        out_shape=jax.ShapeDtypeStruct((Ho, NC * Wo), x.dtype),
        grid_spec=pltpu.PrefetchScalarGridSpec(
            num_scalar_prefetch=0,
            grid=(num_blocks,),
            in_specs=[
                pl.BlockSpec((H, B * W), lambda i: (0, i)),
                pl.BlockSpec((Ho, H), lambda i: (0, 0)),
                pl.BlockSpec((B * W, B * Wo), lambda i: (0, 0)),
            ],
            out_specs=pl.BlockSpec((Ho, B * Wo), lambda i: (0, i)),
        ),
        compiler_params=pltpu.CompilerParams(
            dimension_semantics=("parallel",)),
    )(x_stacked, jnp.asarray(mh), jnp.asarray(mwbd))

    # (Ho, NC*Wo) -> (N, C, Ho, Wo)
    out = out_stacked.reshape(Ho, NC, Wo).transpose(1, 0, 2)
    return out.reshape(N, C, Ho, Wo)


if __name__ == "__main__":
    key = jax.random.PRNGKey(0)
    N, C, H, W = 2, 4, 16, 16
    x = jax.random.normal(key, (N, C, H, W), dtype=jnp.float32)

    out = downsample_forward(x)
    out = jax.block_until_ready(out)

    # Sanity check: kernel vs. plain-JAX application of the same operators.
    ph1, pw1 = _avgpool_matrix(H), _avgpool_matrix(W)
    ph2, pw2 = _avgpool_matrix(ph1.shape[0]), _avgpool_matrix(pw1.shape[0])
    uh = _bilinear_matrix(ph2.shape[0], ph2.shape[0] * 4)
    uw = _bilinear_matrix(pw2.shape[0], pw2.shape[0] * 4)
    mh = jnp.asarray(uh @ ph2 @ ph1, dtype=jnp.float32)
    mw = jnp.asarray(uw @ pw2 @ pw1, dtype=jnp.float32)
    ref = jnp.einsum("oh,nchw,pw->ncop", mh, x, mw)

    assert out.shape == (N, C, 16, 16), out.shape
    np.testing.assert_allclose(np.asarray(out), np.asarray(ref), rtol=1e-5, atol=1e-5)

    print("KERNEL_OK")
</pallas_src>

<mosaic_0001>
module attributes {stable_mosaic.version = 11 : i64} {
  func.func @downsample_kernel(%arg0: i32, %arg1: memref<16x128xf32, #tpu.memory_space<vmem>>, %arg2: memref<16x16xf32, #tpu.memory_space<vmem>>, %arg3: memref<128x128xf32, #tpu.memory_space<vmem>>, %arg4: memref<16x128xf32, #tpu.memory_space<vmem>>) attributes {dimension_semantics = [#tpu.dimension_semantics<parallel>], iteration_bounds = array<i64: 1>, scalar_prefetch = 0 : i64, scratch_operands = 0 : i64, tpu.core_type = #tpu.core_type<tc>, window_params = [{transform_indices = @transform_0, window_bounds = array<i64: 16, 128>}, {pipeline_mode = #tpu.pipeline_mode<synchronous>, transform_indices = @transform_1, window_bounds = array<i64: 16, 16>}, {pipeline_mode = #tpu.pipeline_mode<synchronous>, transform_indices = @transform_2, window_bounds = array<i64: 128, 128>}, {transform_indices = @transform_3, window_bounds = array<i64: 16, 128>}]} {
    %c0 = arith.constant 0 : index
    %c0_0 = arith.constant 0 : index
    %0 = vector.load %arg2[%c0, %c0_0] : memref<16x16xf32, #tpu.memory_space<vmem>>, vector<16x16xf32>
    %c0_1 = arith.constant 0 : index
    %c0_2 = arith.constant 0 : index
    %1 = vector.load %arg1[%c0_1, %c0_2] : memref<16x128xf32, #tpu.memory_space<vmem>>, vector<16x128xf32>
    %cst = arith.constant dense<0.000000e+00> : vector<16x128xf32>
    %2 = tpu.matmul %0, %1, %cst {dimension_numbers = #tpu.dot_dimension_numbers<[1], [0], [0], [1], [0, 0, 1, 1], [], []>} : vector<16x16xf32>, vector<16x128xf32>, vector<16x128xf32> -> vector<16x128xf32>
    %c0_3 = arith.constant 0 : index
    %c0_4 = arith.constant 0 : index
    %3 = vector.load %arg3[%c0_3, %c0_4] : memref<128x128xf32, #tpu.memory_space<vmem>>, vector<128x128xf32>
    %cst_5 = arith.constant dense<0.000000e+00> : vector<16x128xf32>
    %4 = tpu.matmul %2, %3, %cst_5 {dimension_numbers = #tpu.dot_dimension_numbers<[1], [0], [0], [1], [0, 0, 1, 1], [], []>} : vector<16x128xf32>, vector<128x128xf32>, vector<16x128xf32> -> vector<16x128xf32>
    %c0_6 = arith.constant 0 : index
    %c0_7 = arith.constant 0 : index
    %5 = vector.load %arg4[%c0_6, %c0_7] : memref<16x128xf32, #tpu.memory_space<vmem>>, vector<16x128xf32>
    tpu.vector_store %arg4[%c0_6, %c0_7], %4 {strides = array<i32>} : memref<16x128xf32, #tpu.memory_space<vmem>>, vector<16x128xf32>,
    return
  }
  func.func @transform_0(%arg0: i32) -> (i32, i32) {
    %c0_i32 = arith.constant 0 : i32
    %c0_i32_0 = arith.constant 0 : i32
    return %c0_i32, %arg0 : i32, i32
  }
  func.func @transform_1(%arg0: i32) -> (i32, i32) {
    %c0_i32 = arith.constant 0 : i32
    %c0_i32_0 = arith.constant 0 : i32
    %c0_i32_1 = arith.constant 0 : i32
    return %c0_i32, %c0_i32_0 : i32, i32
  }
  func.func @transform_2(%arg0: i32) -> (i32, i32) {
    %c0_i32 = arith.constant 0 : i32
    %c0_i32_0 = arith.constant 0 : i32
    %c0_i32_1 = arith.constant 0 : i32
    return %c0_i32, %c0_i32_0 : i32, i32
  }
  func.func @transform_3(%arg0: i32) -> (i32, i32) {
    %c0_i32 = arith.constant 0 : i32
    %c0_i32_0 = arith.constant 0 : i32
    return %c0_i32, %arg0 : i32, i32
  }
}

</mosaic_0001>

<llo_original>
// kernel: tpu_custom_call.1
$region0: #{tpu_custom_call.1}
  #allocation0 [shape = 'u32[]', space=smem, size = 0x4, offset = 0x4, fixed_abs, tag = 'smem constant byte address 0x4 - core index']
  #allocation1 [shape = 'u32[144,128]{1,0:T(1,128)}', space=vmem, size = 0x12000, scoped, tag = 'internal scratch']
  %s0 = inlined_call_operand.hbm [shape: f32[16,128], index: 0, kind: input, shape index: {}]
  %s1 = inlined_call_operand.hbm [shape: f32[16,16], index: 1, kind: input, shape index: {}]
  %s2 = inlined_call_operand.hbm [shape: f32[128,128], index: 2, kind: input, shape index: {}]
  %s3 = inlined_call_operand.hbm [shape: f32[16,128], index: 3, kind: output, shape index: {}]
  %s4 = sld [smem:[#allocation0]]
  $region34: #{tpu_custom_call.1} parent=0
    _
  %s6 = ssub.s32 1, %s4
  %s7 = scalar_select 0, %s6, %s4
  $region1: #{tpu_custom_call.1} parent=0
    #allocation2 [shape = 'u8[8192]{0}', space=vmem, size = 0x2000, scoped, tag = 'input window, operand 0, single buffered']
    #allocation3 [shape = 's32[1]{0}', space=sflag, size = 0x4, scoped, tag = 'scoped memory for tpu_custom_call.1']
    #allocation4 [shape = 's32[1]{0}', space=sflag, size = 0x4, scoped, tag = 'scoped memory for tpu_custom_call.1']
    #allocation5 [shape = 'u8[8192]{0}', space=vmem, size = 0x2000, scoped, tag = 'input window, operand 1, single buffered']
    #allocation6 [shape = 's32[1]{0}', space=sflag, size = 0x4, scoped, tag = 'scoped memory for tpu_custom_call.1']
    #allocation7 [shape = 'u8[65536]{0}', space=vmem, size = 0x10000, scoped, tag = 'input window, operand 2, single buffered']
    #allocation8 [shape = 'u8[8192]{0}', space=vmem, size = 0x2000, scoped, tag = 'output window, operand 0, single buffered']
    %8 = vsyncpa [#allocation3], 0
    %9 = vsyncpa [#allocation6], 0
    %10 = vsyncpa [#allocation4], 0
    // Predicated region
    $region2: #{tpu_custom_call.1} parent=1 // pred_check
      _
    $region3: #{tpu_custom_call.1} parent=1 // pred_check_branch
      %12 = sbr.rel (0) target = $region5
    $region4: #{tpu_custom_call.1} parent=1 // pred_region
      %s14 = ssub.s32 256, 256
      %15 = vsyncadd [#allocation3], %s14
      %s16 = sshll.u32 [#allocation2], 4
      %s17 = int_to_ptr.vmem [resolvable:$true] %s16
      %22 = dma.hbm_to_vmem [thread:$0]  %s0, 256, %s17, [#allocation3], 128, 128, 8
    $region5: #{tpu_custom_call.1} parent=1 // pred_fallthru
      _
    // Predicated region
    $region6: #{tpu_custom_call.1} parent=1 // pred_check
      _
    $region7: #{tpu_custom_call.1} parent=1 // pred_check_branch
      %24 = sbr.rel (0) target = $region9
    $region8: #{tpu_custom_call.1} parent=1 // pred_region
      %s26 = ssub.s32 256, 256
      %27 = vsyncadd [#allocation6], %s26
      %s28 = sshll.u32 [#allocation5], 4
      %s29 = int_to_ptr.vmem [resolvable:$true] %s28
      %34 = dma.hbm_to_vmem [thread:$0]  %s1, 256, %s29, [#allocation6], 128, 128, 8
    $region9: #{tpu_custom_call.1} parent=1 // pred_fallthru
      _
    // Predicated region
    $region10: #{tpu_custom_call.1} parent=1 // pred_check
      _
    $region11: #{tpu_custom_call.1} parent=1 // pred_check_branch
      %36 = sbr.rel (0) target = $region13
    $region12: #{tpu_custom_call.1} parent=1 // pred_region
      %s38 = ssub.s32 2048, 2048
      %39 = vsyncadd [#allocation6], %s38
      %s40 = sshll.u32 [#allocation7], 4
      %s41 = int_to_ptr.vmem [resolvable:$true] %s40
      %46 = dma.hbm_to_vmem [thread:$0]  %s2, 2048, %s41, [#allocation6], 128, 128, 8
    $region13: #{tpu_custom_call.1} parent=1 // pred_fallthru
      _
    // Predicated region
    $region14: #{tpu_custom_call.1} parent=1 // pred_check
      _
    $region15: #{tpu_custom_call.1} parent=1 // pred_check_branch
      %48 = sbr.rel (0) target = $region17
    $region16: #{tpu_custom_call.1} parent=1 // pred_region
      %49 = dma.done [#allocation3], 256
    $region17: #{tpu_custom_call.1} parent=1 // pred_fallthru
      _
    // Predicated region
    $region18: #{tpu_custom_call.1} parent=1 // pred_check
      _
    $region19: #{tpu_custom_call.1} parent=1 // pred_check_branch
      %51 = sbr.rel (0) target = $region21
    $region20: #{tpu_custom_call.1} parent=1 // pred_region
      %52 = dma.done [#allocation6], 256
    $region21: #{tpu_custom_call.1} parent=1 // pred_fallthru
      _
    // Predicated region
    $region22: #{tpu_custom_call.1} parent=1 // pred_check
      _
    $region23: #{tpu_custom_call.1} parent=1 // pred_check_branch
      %54 = sbr.rel (0) target = $region25
    $region24: #{tpu_custom_call.1} parent=1 // pred_region
      %55 = dma.done [#allocation6], 2048
    $region25: #{tpu_custom_call.1} parent=1 // pred_fallthru
      _
    %v56 = vld [vmem:[#allocation5] sm:$0xff]
    %v57 = vld [vmem:[#allocation5 + $0x8] sm:$0xff]
    %v58 = vld [vmem:[#allocation2] sm:$0xff]
    %v59 = vld [vmem:[#allocation2 + $0x8] sm:$0xff]
    %vm60 = vcmask 130048
    %v62 = vsel %vm60, %v56, 0
    %v65 = vsel %vm60, %v57, 0
    %67 = vmatprep.subr.mxu0 0.0
    %68 = vmatpush1.msra.mxu0 %v58
    %69 = vmatprep.subr.mxu0 0.0
    %70 = vmatpush1.msra.mxu0 %v59
    %71 = vmatprep.subr.mxu0 0.0
    %72 = vmatpush1.msra.mxu0 0.0
    %73 = vmatprep.subr.mxu0 0.0
    %74 = vmatpush1.msra.mxu0 0.0
    %75 = vmatprep.subr.mxu0 0.0
    %76 = vmatpush1.msra.mxu0 0.0
    %77 = vmatprep.subr.mxu0 0.0
    %78 = vmatpush1.msra.mxu0 0.0
    %79 = vmatprep.subr.mxu0 0.0
    %80 = vmatpush1.msra.mxu0 0.0
    %81 = vmatprep.subr.mxu0 0.0
    %82 = vmatpush1.msra.mxu0 0.0
    %83 = vmatprep.subr.mxu0 0.0
    %84 = vmatpush1.msra.mxu0 0.0
    %85 = vmatprep.subr.mxu0 0.0
    %86 = vmatpush1.msra.mxu0 0.0
    %87 = vmatprep.subr.mxu0 0.0
    %88 = vmatpush1.msra.mxu0 0.0
    %89 = vmatprep.subr.mxu0 0.0
    %90 = vmatpush1.msra.mxu0 0.0
    %91 = vmatprep.subr.mxu0 0.0
    %92 = vmatpush1.msra.mxu0 0.0
    %93 = vmatprep.subr.mxu0 0.0
    %94 = vmatpush1.msra.mxu0 0.0
    %95 = vmatprep.subr.mxu0 0.0
    %96 = vmatpush1.msra.mxu0 0.0
    %97 = vmatprep.subr.mxu0 0.0
    %98 = vmatpush1.msra.mxu0 0.0
    %99 = vmatprep.subr.mxu0 0.0
    %100 = vmatpush1.msra.mxu0 0.0
    %101 = vmatprep.subr.mxu0 0.0
    %102 = vmatpush1.msra.mxu0 0.0
    %103 = vmatprep.subr.mxu0 0.0
    %104 = vmatpush1.msra.mxu0 0.0
    %105 = vmatprep.subr.mxu0 0.0
    %106 = vmatpush1.msra.mxu0 0.0
    %107 = vmatprep.subr.mxu0 0.0
    %108 = vmatpush1.msra.mxu0 0.0
    %109 = vmatprep.subr.mxu0 0.0
    %110 = vmatpush1.msra.mxu0 0.0
    %111 = vmatprep.subr.mxu0 0.0
    %112 = vmatpush1.msra.mxu0 0.0
    %113 = vmatprep.subr.mxu0 0.0
    %114 = vmatpush1.msra.mxu0 0.0
    %115 = vmatprep.subr.mxu0 0.0
    %116 = vmatpush1.msra.mxu0 0.0
    %117 = vmatprep.subr.mxu0 0.0
    %118 = vmatpush1.msra.mxu0 0.0
    %119 = vmatprep.subr.mxu0 0.0
    %120 = vmatpush1.msra.mxu0 0.0
    %121 = vmatprep.subr.mxu0 0.0
    %122 = vmatpush1.msra.mxu0 0.0
    %123 = vmatprep.subr.mxu0 0.0
    %124 = vmatpush1.msra.mxu0 0.0
    %125 = vmatprep.subr.mxu0 0.0
    %126 = vmatpush1.msra.mxu0 0.0
    %127 = vmatprep.subr.mxu0 0.0
    %128 = vmatpush1.msra.mxu0 0.0
    %129 = vmatprep.subr.mxu0 0.0
    %130 = vmatpush1.msra.mxu0 0.0
    %131 = vmatprep.mubr.f32.mxu0 0.0
    %132 = vmatmul.mubr.f32.gmra.mrb[0].mxu0 %v62
    %v133 = vpop.f32.mrb[0].mxu0
    %v134 = vadd.f32 0.0, %v133
    %v135 = vpop.f32.mrb[0].mxu0
    %136 = vmatprep.mubr.f32.mxu0 0.0
    %137 = vmatmul.mubr.f32.gmra.mrb[0].mxu0 %v65
    %v138 = vpop.f32.mrb[0].mxu0
    %v139 = vadd.f32 0.0, %v138
    %v140 = vpop.f32.mrb[0].mxu0
    %141 = vdwg.mxu0
    %v142 = vld [vmem:[#allocation7] sm:$0xff]
    %v143 = vld [vmem:[#allocation7 + $0x8] sm:$0xff]
    %v144 = vld [vmem:[#allocation7 + $0x10] sm:$0xff]
    %v145 = vld [vmem:[#allocation7 + $0x18] sm:$0xff]
    %v146 = vld [vmem:[#allocation7 + $0x20] sm:$0xff]
    %v147 = vld [vmem:[#allocation7 + $0x28] sm:$0xff]
    %v148 = vld [vmem:[#allocation7 + $0x30] sm:$0xff]
    %v149 = vld [vmem:[#allocation7 + $0x38] sm:$0xff]
    %v150 = vld [vmem:[#allocation7 + $0x40] sm:$0xff]
    %v151 = vld [vmem:[#allocation7 + $0x48] sm:$0xff]
    %v152 = vld [vmem:[#allocation7 + $0x50] sm:$0xff]
    %v153 = vld [vmem:[#allocation7 + $0x58] sm:$0xff]
    %v154 = vld [vmem:[#allocation7 + $0x60] sm:$0xff]
    %v155 = vld [vmem:[#allocation7 + $0x68] sm:$0xff]
    %v156 = vld [vmem:[#allocation7 + $0x70] sm:$0xff]
    %v157 = vld [vmem:[#allocation7 + $0x78] sm:$0xff]
    %158 = vmatprep.subr.mxu0 0.0
    %159 = vmatpush1.msra.mxu0 %v142
    %160 = vmatprep.subr.mxu0 0.0
    %161 = vmatpush1.msra.mxu0 %v143
    %162 = vmatprep.subr.mxu0 0.0
    %163 = vmatpush1.msra.mxu0 %v144
    %164 = vmatprep.subr.mxu0 0.0
    %165 = vmatpush1.msra.mxu0 %v145
    %166 = vmatprep.subr.mxu0 0.0
    %167 = vmatpush1.msra.mxu0 %v146
    %168 = vmatprep.subr.mxu0 0.0
    %169 = vmatpush1.msra.mxu0 %v147
    %170 = vmatprep.subr.mxu0 0.0
    %171 = vmatpush1.msra.mxu0 %v148
    %172 = vmatprep.subr.mxu0 0.0
    %173 = vmatpush1.msra.mxu0 %v149
    %174 = vmatprep.subr.mxu0 0.0
    %175 = vmatpush1.msra.mxu0 %v150
    %176 = vmatprep.subr.mxu0 0.0
    %177 = vmatpush1.msra.mxu0 %v151
    %178 = vmatprep.subr.mxu0 0.0
    %179 = vmatpush1.msra.mxu0 %v152
    %180 = vmatprep.subr.mxu0 0.0
    %181 = vmatpush1.msra.mxu0 %v153
    %182 = vmatprep.subr.mxu0 0.0
    %183 = vmatpush1.msra.mxu0 %v154
    %184 = vmatprep.subr.mxu0 0.0
    %185 = vmatpush1.msra.mxu0 %v155
    %186 = vmatprep.subr.mxu0 0.0
    %187 = vmatpush1.msra.mxu0 %v156
    %188 = vmatprep.subr.mxu0 0.0
    %189 = vmatpush1.msra.mxu0 %v157
    %190 = vmatprep.subr.mxu0 0.0
    %191 = vmatpush1.msra.mxu0 0.0
    %192 = vmatprep.subr.mxu0 0.0
    %193 = vmatpush1.msra.mxu0 0.0
    %194 = vmatprep.subr.mxu0 0.0
    %195 = vmatpush1.msra.mxu0 0.0
    %196 = vmatprep.subr.mxu0 0.0
    %197 = vmatpush1.msra.mxu0 0.0
    %198 = vmatprep.subr.mxu0 0.0
    %199 = vmatpush1.msra.mxu0 0.0
    %200 = vmatprep.subr.mxu0 0.0
    %201 = vmatpush1.msra.mxu0 0.0
    %202 = vmatprep.subr.mxu0 0.0
    %203 = vmatpush1.msra.mxu0 0.0
    %204 = vmatprep.subr.mxu0 0.0
    %205 = vmatpush1.msra.mxu0 0.0
    %206 = vmatprep.subr.mxu0 0.0
    %207 = vmatpush1.msra.mxu0 0.0
    %208 = vmatprep.subr.mxu0 0.0
    %209 = vmatpush1.msra.mxu0 0.0
    %210 = vmatprep.subr.mxu0 0.0
    %211 = vmatpush1.msra.mxu0 0.0
    %212 = vmatprep.subr.mxu0 0.0
    %213 = vmatpush1.msra.mxu0 0.0
    %214 = vmatprep.subr.mxu0 0.0
    %215 = vmatpush1.msra.mxu0 0.0
    %216 = vmatprep.subr.mxu0 0.0
    %217 = vmatpush1.msra.mxu0 0.0
    %218 = vmatprep.subr.mxu0 0.0
    %219 = vmatpush1.msra.mxu0 0.0
    %220 = vmatprep.subr.mxu0 0.0
    %221 = vmatpush1.msra.mxu0 0.0
    %222 = vmatprep.mubr.f32.mxu0 0.0
    %223 = vmatmul.mubr.f32.gmra.mrb[0].mxu0 %v134
    %v224 = vpop.f32.mrb[0].mxu0
    %v225 = vadd.f32 0.0, %v224
    %v226 = vpop.f32.mrb[0].mxu0
    %227 = vmatprep.mubr.f32.mxu0 0.0
    %228 = vmatmul.mubr.f32.gmra.mrb[0].mxu0 %v139
    %v229 = vpop.f32.mrb[0].mxu0
    %v230 = vadd.f32 0.0, %v229
    %v231 = vpop.f32.mrb[0].mxu0
    %232 = vdwg.mxu0
    %233 = vst [vmem:[#allocation8] sm:$0xff] %v225
    %234 = vst [vmem:[#allocation8 + $0x8] sm:$0xff] %v230
    // Predicated region
    $region26: #{tpu_custom_call.1} parent=1 // pred_check
      _
    $region27: #{tpu_custom_call.1} parent=1 // pred_check_branch
      %236 = sbr.rel (0) target = $region29
    $region28: #{tpu_custom_call.1} parent=1 // pred_region
      %s238 = ssub.s32 256, 256
      %239 = vsyncadd [#allocation4], %s238
      %s240 = sshll.u32 [#allocation8], 4
      %s241 = int_to_ptr.vmem [resolvable:$true] %s240
      %246 = dma.vmem_to_hbm [thread:$0]  %s241, 256, %s3, [#allocation4], 128, 128, 8
    $region29: #{tpu_custom_call.1} parent=1 // pred_fallthru
      _
    // Predicated region
    $region30: #{tpu_custom_call.1} parent=1 // pred_check
      _
    $region31: #{tpu_custom_call.1} parent=1 // pred_check_branch
      %248 = sbr.rel (0) target = $region33
    $region32: #{tpu_custom_call.1} parent=1 // pred_region
      %249 = dma.done [#allocation4], 256
    $region33: #{tpu_custom_call.1} parent=1 // pred_fallthru
      _
    %250 = vsyncpa [#allocation3], 1
    %251 = vsyncpa [#allocation6], 1
    %252 = vsyncpa [#allocation4], 1

</llo_original>
